<compile_context>
chip_gen: v7x
topology: tpu7x:2x2x1
jax: 0.10.0
libtpu: 0.0.40
codegen_flags: <defaults>
</compile_context>

<pallas_src>
import jax
import jax.numpy as jnp
from jax import lax
from jax.experimental import pallas as pl
from jax.experimental.pallas import tpu as pltpu


def _round_up(x, m):
    return (x + m - 1) // m * m


# ---------------------------------------------------------------------------
# Pallas kernel: 2-hot fused gather+layer1, then the small packed MLP tail.
# Everything is transposed: activations are (features, TB); TB is lane-major.
# ---------------------------------------------------------------------------
def _make_ncf_kernel(h1, h2, h3):
    # Packed-tail column offsets (see ncf_forward for the layout).
    col_b2 = h1 + h2
    col_b3 = col_b2 + 1
    col_w4 = col_b2 + 2
    col_b4 = col_b2 + 3

    def kernel(ids_ref, cwt_ref, tail_ref, out_ref):
        f32 = jnp.float32
        tb = ids_ref.shape[1]
        kc = cwt_ref.shape[1]

        ids = ids_ref[...]                     # (2, TB) int32; row 1 already offset by U
        uid = ids[0:1, :]                      # (1, TB)
        mid = ids[1:2, :]                      # (1, TB)

        # 2-hot selection against the fused [user | movie] table: exactly two
        # 1.0s per column, so this single matmul == gather + concat + layer 1
        # (b1 is folded into the user half of cwt by the wrapper).
        row = lax.broadcasted_iota(jnp.int32, (kc, tb), 0)
        sel = jnp.logical_or(row == uid, row == mid).astype(f32)      # (Kc, TB)
        h = jnp.dot(cwt_ref[...], sel, preferred_element_type=f32)    # (H1, TB)
        h = jnp.maximum(h, 0.0)

        tail = tail_ref[...]                   # packed (rows, H1+H2+4) MLP tail
        w2t = tail[0:h2, 0:h1]                 # (H2, H1)
        w3t = tail[0:h3, h1:h1 + h2]           # (H3, H2)
        b2c = tail[0:h2, col_b2:col_b2 + 1]    # (H2, 1)
        b3c = tail[0:h3, col_b3:col_b3 + 1]    # (H3, 1)
        w4c = tail[0:h3, col_w4:col_w4 + 1]    # (H3, 1)
        b4s = tail[0:1, col_b4:col_b4 + 1]     # (1, 1)

        h = jnp.maximum(jnp.dot(w2t, h, preferred_element_type=f32) + b2c, 0.0)  # (H2, TB)
        h = jnp.maximum(jnp.dot(w3t, h, preferred_element_type=f32) + b3c, 0.0)  # (H3, TB)

        # Final H3 -> 1 on the VPU/XLU (broadcast-mul + sublane reduce): result
        # is already lane-dense (1, TB) -> full-width stores, contiguous DMA.
        y = jnp.sum(h * w4c, axis=0, keepdims=True) + b4s                         # (1, TB)
        out_ref[...] = y.astype(out_ref.dtype)

    return kernel


# ---------------------------------------------------------------------------
# Wrapper: fusion/packing, lane-dense batch tiling, pallas_call.
# ---------------------------------------------------------------------------
def ncf_forward(params, user_id, movie_id, *, batch_tile=2048):
    user_emb = params["user_emb"]
    movie_emb = params["movie_emb"]
    U, E = user_emb.shape
    M = movie_emb.shape[0]
    w1, b1 = params["w1"], params["b1"]
    w2, b2 = params["w2"], params["b2"]
    w3, b3 = params["w3"], params["b3"]
    w4, b4 = params["w4"], params["b4"]
    assert w1.shape[0] == 2 * E, "first hidden layer must be 2 * embedding_size"
    H1, H2, H3 = w1.shape[1], w2.shape[1], w3.shape[1]

    # ---- Fuse gather + layer 1 (one-time, f32-exact): Cw^T with b1 folded in.
    hp = jax.lax.Precision.HIGHEST
    cw_u = jnp.dot(user_emb, w1[:E, :], precision=hp) + b1      # (U, H1)
    cw_m = jnp.dot(movie_emb, w1[E:, :], precision=hp)          # (M, H1)
    Kc = _round_up(U + M, 128)
    cwt = jnp.zeros((H1, Kc), jnp.float32)
    cwt = cwt.at[:, :U].set(cw_u.T).at[:, U:U + M].set(cw_m.T)  # (H1, Kc)

    # ---- Pack the MLP tail into ONE small resident operand.
    #   rows [0:H2], cols [0:H1]          w2^T
    #   rows [0:H3], cols [H1:H1+H2]      w3^T
    #   rows [0:H2], col  H1+H2           b2
    #   rows [0:H3], col  H1+H2+1         b3
    #   rows [0:H3], col  H1+H2+2         w4
    #   row  0     , col  H1+H2+3         b4
    rows = _round_up(max(H2, H3), 8)
    cols = H1 + H2 + 4
    tail = jnp.zeros((rows, cols), jnp.float32)
    tail = tail.at[0:H2, 0:H1].set(w2.T)
    tail = tail.at[0:H3, H1:H1 + H2].set(w3.T)
    tail = tail.at[0:H2, H1 + H2].set(b2.reshape(H2))
    tail = tail.at[0:H3, H1 + H2 + 1].set(b3.reshape(H3))
    tail = tail.at[0:H3, H1 + H2 + 2].set(w4.reshape(H3))
    tail = tail.at[0, H1 + H2 + 3].set(b4[0, 0])

    # ---- ids: hash-mod (as in the PyTorch forward), offset movie ids into the
    # combined table, and pack both streams into a single (2, Bp) operand.
    uid = jnp.mod(user_id.astype(jnp.int32), U)
    mid = jnp.mod(movie_id.astype(jnp.int32), M) + U
    B = int(uid.shape[0])

    # ---- Lane-dense batch tiling: tb is a multiple of 128 (lane width).  Keep
    # >= 2 grid steps when the batch spans more than one minimal tile so that
    # dimension_semantics=("parallel",) can use both TensorCores on v7x.
    lane = 128
    need = _round_up(max(B, 1), lane)
    tb = max(lane, min((batch_tile // lane) * lane, need))
    if need > lane:
        while tb > lane and (need + tb - 1) // tb < 2:
            tb = max(lane, (tb // 2) // lane * lane)
    Bp = _round_up(need, tb)
    ids = jnp.stack([uid, mid], axis=0)                 # (2, B)
    ids = jnp.pad(ids, ((0, 0), (0, Bp - B)))           # padded cols -> discarded rows
    grid = (Bp // tb,)

    # ---- Specs: ids/out stream per tile; fused table + tail are resident
    # (constant index map) and single-buffered (no pointless double buffer).
    def resident(a):
        return pl.BlockSpec(a.shape, lambda i: (0, 0),
                            pipeline_mode=pl.Buffered(1))

    in_specs = [
        pl.BlockSpec((2, tb), lambda i: (0, i)),        # ids, streamed
        resident(cwt),                                  # fused table, resident
        resident(tail),                                 # packed MLP tail, resident
    ]
    out_specs = pl.BlockSpec((1, tb), lambda i: (0, i))

    # ---- VMEM budget: resident operands + double-buffered streams + in-kernel
    # one-hot/activation temporaries, 2x headroom, floored at 32 MiB, capped at
    # half the chip's VMEM (per-generation: v5e/v6e 128 MiB, v7x 64 MiB).
    try:
        vmem_cap = pltpu.get_tpu_info().vmem_capacity_bytes
    except Exception:
        vmem_cap = 64 << 20                             # conservative (v7x per-core)
    est = (cwt.size * 4 + tail.size * 4                 # resident operands
           + 2 * 2 * (8 * tb * 4)                       # ids/out streams, 2-buffered, 8-sublane padded
           + 4 * (Kc * tb * 4)                          # iota / mask / one-hot temporaries
           + 4 * (H1 * tb * 4))                         # activations
    vmem_limit = int(min(max(2 * est, 32 << 20), max(32 << 20, vmem_cap // 2)))

    flops = 2 * Bp * (Kc * H1 + H1 * H2 + H2 * H3 + H3)
    bytes_accessed = int(ids.size * 4 + cwt.size * 4 + tail.size * 4 + Bp * 4)
    cost = pl.CostEstimate(flops=flops, transcendentals=0,
                           bytes_accessed=bytes_accessed)

    out = pl.pallas_call(
        _make_ncf_kernel(H1, H2, H3),
        out_shape=jax.ShapeDtypeStruct((1, Bp), jnp.float32),
        grid=grid,
        in_specs=in_specs,
        out_specs=out_specs,
        compiler_params=pltpu.CompilerParams(
            dimension_semantics=("parallel",),
            vmem_limit_bytes=vmem_limit),
        cost_estimate=cost,
    )(ids, cwt, tail)

    return out.reshape(-1)[:B]                          # == x.view(-1)


# ---------------------------------------------------------------------------
# Deterministic parameter init (mirrors NCF._init_params)
# ---------------------------------------------------------------------------
def init_ncf_params(key, user_count, movie_count,
                    embedding_size=32, hidden_layers=(64, 32, 16, 8)):
    assert embedding_size * 2 == hidden_layers[0]
    keys = jax.random.split(key, 8)

    def xavier_uniform(k, fan_in, fan_out):
        bound = jnp.sqrt(6.0 / (fan_in + fan_out))
        # stored as (in, out); the model computes x @ W
        return jax.random.uniform(k, (fan_in, fan_out), jnp.float32, -bound, bound)

    dims = list(hidden_layers) + [1]  # 64 -> 32 -> 16 -> 8 -> 1
    params = {
        "user_emb": jax.random.uniform(keys[0], (user_count, embedding_size),
                                       jnp.float32, -0.05, 0.05),
        "movie_emb": jax.random.uniform(keys[1], (movie_count, embedding_size),
                                        jnp.float32, -0.05, 0.05),
    }
    for i in range(4):
        params[f"w{i+1}"] = xavier_uniform(keys[2 + i], dims[i], dims[i + 1])
        params[f"b{i+1}"] = jnp.full((1, dims[i + 1]), 0.01, jnp.float32)
    return params


# ---------------------------------------------------------------------------
# Pure-JAX reference (f32 / HIGHEST precision, matching the PyTorch numerics)
# ---------------------------------------------------------------------------
def ncf_reference(params, user_id, movie_id):
    hp = jax.lax.Precision.HIGHEST
    uc = params["user_emb"].shape[0]
    mc = params["movie_emb"].shape[0]
    uf = params["user_emb"][jnp.mod(user_id, uc)]
    mf = params["movie_emb"][jnp.mod(movie_id, mc)]
    x = jnp.concatenate([uf, mf], axis=1)
    x = jnp.maximum(jnp.dot(x, params["w1"], precision=hp) + params["b1"], 0.0)
    x = jnp.maximum(jnp.dot(x, params["w2"], precision=hp) + params["b2"], 0.0)
    x = jnp.maximum(jnp.dot(x, params["w3"], precision=hp) + params["b3"], 0.0)
    x = jnp.dot(x, params["w4"], precision=hp) + params["b4"]
    return x.reshape(-1)


if __name__ == "__main__":
    key = jax.random.PRNGKey(0)
    pkey, ukey, mkey = jax.random.split(key, 3)

    USER_COUNT, MOVIE_COUNT = 100, 200
    EMBEDDING_SIZE = 32
    BATCH = 300          # ragged: pads to 384 -> three 128-wide lane tiles (multi-step grid)

    params = init_ncf_params(pkey, USER_COUNT, MOVIE_COUNT, EMBEDDING_SIZE)

    user_id = jax.random.randint(ukey, (BATCH,), 0, 10_000, dtype=jnp.int32)
    movie_id = jax.random.randint(mkey, (BATCH,), 0, 10_000, dtype=jnp.int32)

    # small batch tile so the test exercises several grid steps + batch padding
    out = ncf_forward(params, user_id, movie_id, batch_tile=128)
    out = jax.block_until_ready(out)

    ref = ncf_reference(params, user_id, movie_id)
    assert out.shape == (BATCH,), out.shape
    assert jnp.allclose(out, ref, atol=1e-5, rtol=1e-5), (
        float(jnp.max(jnp.abs(out - ref))))

    print("KERNEL_OK")
</pallas_src>

<mosaic_0001>
module attributes {stable_mosaic.version = 11 : i64} {
  func.func @kernel(%arg0: i32, %arg1: memref<2x128xi32, #tpu.memory_space<vmem>>, %arg2: memref<32x384xf32, #tpu.memory_space<vmem>>, %arg3: memref<16x52xf32, #tpu.memory_space<vmem>>, %arg4: memref<1x128xf32, #tpu.memory_space<vmem>>) attributes {dimension_semantics = [#tpu.dimension_semantics<parallel>], iteration_bounds = array<i64: 3>, scalar_prefetch = 0 : i64, scratch_operands = 0 : i64, tpu.core_type = #tpu.core_type<tc>, window_params = [{transform_indices = @transform_0, window_bounds = array<i64: 2, 128>}, {pipeline_mode = #tpu.pipeline_mode<synchronous>, transform_indices = @transform_1, window_bounds = array<i64: 32, 384>}, {pipeline_mode = #tpu.pipeline_mode<synchronous>, transform_indices = @transform_2, window_bounds = array<i64: 16, 52>}, {transform_indices = @transform_3, window_bounds = array<i64: 1, 128>}]} {
    %c0 = arith.constant 0 : index
    %c0_0 = arith.constant 0 : index
    %0 = vector.load %arg1[%c0, %c0_0] : memref<2x128xi32, #tpu.memory_space<vmem>>, vector<2x128xi32>
    %1 = vector.extract_strided_slice %0 {offsets = [0, 0], sizes = [1, 128], strides = [1, 1]} : vector<2x128xi32> to vector<1x128xi32>
    %2 = vector.extract_strided_slice %0 {offsets = [1, 0], sizes = [1, 128], strides = [1, 1]} : vector<2x128xi32> to vector<1x128xi32>
    %3 = tpu.iota {dimensions = array<i32: 0>} : vector<384x128xi32>
    %4 = vector.broadcast %1 : vector<1x128xi32> to vector<384x128xi32>
    %5 = arith.cmpi eq, %3, %4 : vector<384x128xi32>
    %6 = vector.broadcast %2 : vector<1x128xi32> to vector<384x128xi32>
    %7 = arith.cmpi eq, %3, %6 : vector<384x128xi32>
    %8 = arith.ori %5, %7 : vector<384x128xi1>
    %9 = arith.extui %8 : vector<384x128xi1> to vector<384x128xi32>
    %10 = arith.sitofp %9 : vector<384x128xi32> to vector<384x128xf32>
    %c0_1 = arith.constant 0 : index
    %c0_2 = arith.constant 0 : index
    %11 = vector.load %arg2[%c0_1, %c0_2] : memref<32x384xf32, #tpu.memory_space<vmem>>, vector<32x384xf32>
    %cst = arith.constant dense<0.000000e+00> : vector<32x128xf32>
    %12 = tpu.matmul %11, %10, %cst {dimension_numbers = #tpu.dot_dimension_numbers<[1], [0], [0], [1], [0, 0, 1, 1], [], []>} : vector<32x384xf32>, vector<384x128xf32>, vector<32x128xf32> -> vector<32x128xf32>
    %cst_3 = arith.constant 0.000000e+00 : f32
    %13 = vector.broadcast %cst_3 : f32 to vector<32x128xf32>
    %14 = arith.maximumf %12, %13 : vector<32x128xf32>
    %c0_4 = arith.constant 0 : index
    %c0_5 = arith.constant 0 : index
    %15 = vector.load %arg3[%c0_4, %c0_5] : memref<16x52xf32, #tpu.memory_space<vmem>>, vector<16x52xf32>
    %16 = vector.extract_strided_slice %15 {offsets = [0, 0], sizes = [16, 32], strides = [1, 1]} : vector<16x52xf32> to vector<16x32xf32>
    %17 = vector.extract_strided_slice %15 {offsets = [0, 32], sizes = [8, 16], strides = [1, 1]} : vector<16x52xf32> to vector<8x16xf32>
    %18 = vector.extract_strided_slice %15 {offsets = [0, 48], sizes = [16, 1], strides = [1, 1]} : vector<16x52xf32> to vector<16x1xf32>
    %19 = vector.extract_strided_slice %15 {offsets = [0, 49], sizes = [8, 1], strides = [1, 1]} : vector<16x52xf32> to vector<8x1xf32>
    %20 = vector.extract_strided_slice %15 {offsets = [0, 50], sizes = [8, 1], strides = [1, 1]} : vector<16x52xf32> to vector<8x1xf32>
    %21 = vector.extract_strided_slice %15 {offsets = [0, 51], sizes = [1, 1], strides = [1, 1]} : vector<16x52xf32> to vector<1x1xf32>
    %cst_6 = arith.constant dense<0.000000e+00> : vector<16x128xf32>
    %22 = tpu.matmul %16, %14, %cst_6 {dimension_numbers = #tpu.dot_dimension_numbers<[1], [0], [0], [1], [0, 0, 1, 1], [], []>} : vector<16x32xf32>, vector<32x128xf32>, vector<16x128xf32> -> vector<16x128xf32>
    %23 = vector.broadcast %18 : vector<16x1xf32> to vector<16x128xf32>
    %24 = arith.addf %22, %23 : vector<16x128xf32>
    %cst_7 = arith.constant 0.000000e+00 : f32
    %25 = vector.broadcast %cst_7 : f32 to vector<16x128xf32>
    %26 = arith.maximumf %24, %25 : vector<16x128xf32>
    %cst_8 = arith.constant dense<0.000000e+00> : vector<8x128xf32>
    %27 = tpu.matmul %17, %26, %cst_8 {dimension_numbers = #tpu.dot_dimension_numbers<[1], [0], [0], [1], [0, 0, 1, 1], [], []>} : vector<8x16xf32>, vector<16x128xf32>, vector<8x128xf32> -> vector<8x128xf32>
    %28 = vector.broadcast %19 : vector<8x1xf32> to vector<8x128xf32>
    %29 = arith.addf %27, %28 : vector<8x128xf32>
    %cst_9 = arith.constant 0.000000e+00 : f32
    %30 = vector.broadcast %cst_9 : f32 to vector<8x128xf32>
    %31 = arith.maximumf %29, %30 : vector<8x128xf32>
    %32 = vector.broadcast %20 : vector<8x1xf32> to vector<8x128xf32>
    %33 = arith.mulf %31, %32 : vector<8x128xf32>
    %cst_10 = arith.constant dense<0.000000e+00> : vector<128xf32>
    %34 = vector.multi_reduction <add>, %33, %cst_10 [0] : vector<8x128xf32> to vector<128xf32>
    %35 = vector.shape_cast %34 : vector<128xf32> to vector<1x128xf32>
    %36 = vector.broadcast %21 : vector<1x1xf32> to vector<1x128xf32>
    %37 = arith.addf %35, %36 : vector<1x128xf32>
    %c0_11 = arith.constant 0 : index
    %c0_12 = arith.constant 0 : index
    %38 = vector.load %arg4[%c0_11, %c0_12] : memref<1x128xf32, #tpu.memory_space<vmem>>, vector<1x128xf32>
    tpu.vector_store %arg4[%c0_11, %c0_12], %37 {strides = array<i32>} : memref<1x128xf32, #tpu.memory_space<vmem>>, vector<1x128xf32>,
    return
  }
  func.func @transform_0(%arg0: i32) -> (i32, i32) {
    %c0_i32 = arith.constant 0 : i32
    %c0_i32_0 = arith.constant 0 : i32
    return %c0_i32, %arg0 : i32, i32
  }
  func.func @transform_1(%arg0: i32) -> (i32, i32) {
    %c0_i32 = arith.constant 0 : i32
    %c0_i32_0 = arith.constant 0 : i32
    %c0_i32_1 = arith.constant 0 : i32
    return %c0_i32, %c0_i32_0 : i32, i32
  }
  func.func @transform_2(%arg0: i32) -> (i32, i32) {
    %c0_i32 = arith.constant 0 : i32
    %c0_i32_0 = arith.constant 0 : i32
    %c0_i32_1 = arith.constant 0 : i32
    return %c0_i32, %c0_i32_0 : i32, i32
  }
  func.func @transform_3(%arg0: i32) -> (i32, i32) {
    %c0_i32 = arith.constant 0 : i32
    %c0_i32_0 = arith.constant 0 : i32
    return %c0_i32, %arg0 : i32, i32
  }
}

</mosaic_0001>

<llo_original>
// kernel: tpu_custom_call.1
$region0: #{tpu_custom_call.1}
  #allocation0 [shape = 'u32[]', space=smem, size = 0x4, offset = 0x4, fixed_abs, tag = 'smem constant byte address 0x4 - core index']
  #allocation1 [shape = 'u32[144,128]{1,0:T(1,128)}', space=vmem, size = 0x12000, scoped, tag = 'internal scratch']
  %s0 = inlined_call_operand.hbm [shape: s32[2,384], index: 0, kind: input, shape index: {}]
  %s1 = inlined_call_operand.hbm [shape: f32[32,384], index: 1, kind: input, shape index: {}]
  %s2 = inlined_call_operand.hbm [shape: f32[16,52], index: 2, kind: input, shape index: {}]
  %s3 = inlined_call_operand.hbm [shape: f32[1,384], index: 3, kind: output, shape index: {}]
  %s4 = sld [smem:[#allocation0]]
  $region57: #{tpu_custom_call.1} parent=0
    _
  %s6 = ssub.s32 1, %s4
  %s7 = scalar_select 0, %s6, %s4
  $region1: #{tpu_custom_call.1} parent=0
    #allocation2 [shape = 'u8[2048]{0}', space=vmem, size = 0x800, scoped, tag = 'input window, operand 0']
    #allocation3 [shape = 's32[2]{0}', space=sflag, size = 0x8, scoped, tag = 'scoped memory for tpu_custom_call.1']
    #allocation4 [shape = 's32[2]{0}', space=sflag, size = 0x8, scoped, tag = 'scoped memory for tpu_custom_call.1']
    #allocation5 [shape = 'u8[49152]{0}', space=vmem, size = 0xc000, scoped, tag = 'input window, operand 1, single buffered']
    #allocation6 [shape = 's32[1]{0}', space=sflag, size = 0x4, scoped, tag = 'scoped memory for tpu_custom_call.1']
    #allocation7 [shape = 'u8[8192]{0}', space=vmem, size = 0x2000, scoped, tag = 'input window, operand 2, single buffered']
    #allocation8 [shape = 'u8[1024]{0}', space=vmem, size = 0x400, scoped, tag = 'output window, operand 0']
    %8 = vsyncpa [#allocation3], 0
    %s9 = scalar_lea.sflag [#allocation3], 1
    %10 = vsyncpa %s9, 0
    %11 = vsyncpa [#allocation6], 0
    %12 = vsyncpa [#allocation4], 0
    %s13 = scalar_lea.sflag [#allocation4], 1
    %14 = vsyncpa %s13, 0
    loop: start=0, step=1, limit=5
    $region2: #{tpu_custom_call.1} parent=1 // loop_pre_header
      _
    $region3: #{tpu_custom_call.1} parent=1 // loop_header
      %s16 = sphi 0, %s20
      %p17 = scmp.ge.s32.totalorder %s16, 5
      %s26 = sphi 0, %s28
      %s29 = sphi 0, %s26
      %s30 = sphi 0, %s29
      %s46 = sphi 0, %s30
      %s50 = sphi 0, %s50
      %s52 = sphi 0, %s50
      %s53 = sphi 0, %s52
      %s67 = sphi 0, %s53
      %s71 = sphi 0, %s71
      %s73 = sphi 0, %s71
      %s74 = sphi 0, %s73
      %s88 = sphi 0, %s74
      %s94 = sphi 0, %s96
      %s97 = sphi 0, %s94
      %s98 = sphi 0, %s97
      %s114 = sphi 0, %s98
    $region4: #{tpu_custom_call.1} parent=1 // loop_header_branch
      %19 = sbr.rel (%p17) target = $region8
    $region5: #{tpu_custom_call.1} parent=1 // loop_body
      %s21 = ssub.s32 %s16, 1
      %s22 = ssub.s32 %s16, 2
      %s23 = sadd.s32 %s16, 1
      %s24 = ssub.s32 %s16, %s23
      %p25 = scmp.eq.s32.totalorder %s24, 0
      %s27 = sadd.s32 %s26, 1
      %s28 = scalar_select %p25, %s26, %s27
      %p31 = pneg %p25
      %p32 = scmp.eq.s32.totalorder %s16, 2
      %p33 = por %p31, %p32
      %p34 = scmp.ne.s32.totalorder %s26, %s29
      %p35 = scmp.eq.s32.totalorder %s16, 0
      %p36 = por %p34, %p35
      %p37 = scmp.ne.s32.totalorder %s26, %s29
      %p38 = scmp.eq.s32.totalorder %s21, 2
      %p39 = por %p37, %p38
      %p40 = scmp.ne.s32.totalorder %s29, %s30
      %p41 = scmp.eq.s32.totalorder %s21, 0
      %p42 = por %p40, %p41
      %p43 = scmp.ne.s32.totalorder %s29, %s30
      %p44 = scmp.eq.s32.totalorder %s22, 2
      %p45 = por %p43, %p44
      %p47 = scmp.ne.s32.totalorder %s30, %s46
      %p48 = scmp.eq.s32.totalorder %s22, 0
      %p49 = por %p47, %p48
      %s51 = sadd.s32 %s50, 1
      %p54 = scmp.eq.s32.totalorder %s16, 2
      %p55 = scmp.ne.s32.totalorder %s50, %s52
      %p56 = scmp.eq.s32.totalorder %s16, 0
      %p57 = por %p55, %p56
      %p58 = scmp.ne.s32.totalorder %s50, %s52
      %p59 = scmp.eq.s32.totalorder %s21, 2
      %p60 = por %p58, %p59
      %p61 = scmp.ne.s32.totalorder %s52, %s53
      %p62 = scmp.eq.s32.totalorder %s21, 0
      %p63 = por %p61, %p62
      %p64 = scmp.ne.s32.totalorder %s52, %s53
      %p65 = scmp.eq.s32.totalorder %s22, 2
      %p66 = por %p64, %p65
      %p68 = scmp.ne.s32.totalorder %s53, %s67
      %p69 = scmp.eq.s32.totalorder %s22, 0
      %p70 = por %p68, %p69
      %s72 = sadd.s32 %s71, 1
      %p75 = scmp.eq.s32.totalorder %s16, 2
      %p76 = scmp.ne.s32.totalorder %s71, %s73
      %p77 = scmp.eq.s32.totalorder %s16, 0
      %p78 = por %p76, %p77
      %p79 = scmp.ne.s32.totalorder %s71, %s73
      %p80 = scmp.eq.s32.totalorder %s21, 2
      %p81 = por %p79, %p80
      %p82 = scmp.ne.s32.totalorder %s73, %s74
      %p83 = scmp.eq.s32.totalorder %s21, 0
      %p84 = por %p82, %p83
      %p85 = scmp.ne.s32.totalorder %s73, %s74
      %p86 = scmp.eq.s32.totalorder %s22, 2
      %p87 = por %p85, %p86
      %p89 = scmp.ne.s32.totalorder %s74, %s88
      %p90 = scmp.eq.s32.totalorder %s22, 0
      %p91 = por %p89, %p90
      %s92 = ssub.s32 %s16, %s23
      %p93 = scmp.eq.s32.totalorder %s92, 0
      %s95 = sadd.s32 %s94, 1
      %s96 = scalar_select %p93, %s94, %s95
      %p99 = pneg %p93
      %p100 = scmp.eq.s32.totalorder %s16, 2
      %p101 = por %p99, %p100
      %p102 = scmp.ne.s32.totalorder %s94, %s97
      %p103 = scmp.eq.s32.totalorder %s16, 0
      %p104 = por %p102, %p103
      %p105 = scmp.ne.s32.totalorder %s94, %s97
      %p106 = scmp.eq.s32.totalorder %s21, 2
      %p107 = por %p105, %p106
      %p108 = scmp.ne.s32.totalorder %s97, %s98
      %p109 = scmp.eq.s32.totalorder %s21, 0
      %p110 = por %p108, %p109
      %p111 = scmp.ne.s32.totalorder %s97, %s98
      %p112 = scmp.eq.s32.totalorder %s22, 2
      %p113 = por %p111, %p112
      %p115 = scmp.ne.s32.totalorder %s98, %s114
      %p116 = scmp.eq.s32.totalorder %s22, 0
      %p117 = por %p115, %p116
      %p118 = scmp.le.s32.totalorder 1, %s16
      %p119 = scmp.lt.s32.totalorder %s16, 4
      %p120 = pnand %p118, %p119
      %p121 = pneg %p120
      // Predicated region
      $region9: #{tpu_custom_call.1} parent=5 // pred_check
        _
      $region10: #{tpu_custom_call.1} parent=5 // pred_check_branch
        %123 = sbr.rel (%p120) target = $region12
      $region11: #{tpu_custom_call.1} parent=5 // pred_region
        %s124 = ssub.s32 %s16, 1
        // Predicated region
        $region13: #{tpu_custom_call.1} parent=11 // pred_check
          %p125 = pneg %p63
        $region14: #{tpu_custom_call.1} parent=11 // pred_check_branch
          %127 = sbr.rel (%p125) target = $region16
        $region15: #{tpu_custom_call.1} parent=11 // pred_region
          %s129 = ssub.s32 1536, 1536
          %130 = vsyncadd [#allocation6], %s129
          %s131 = sshll.u32 [#allocation5], 4
          %s132 = int_to_ptr.vmem [resolvable:$true] %s131
          %137 = dma.hbm_to_vmem [thread:$0]  %s1, 1536, %s132, [#allocation6], 384, 384, 24
        $region16: #{tpu_custom_call.1} parent=11 // pred_fallthru
          _
        // Predicated region
        $region17: #{tpu_custom_call.1} parent=11 // pred_check
          %p138 = pneg %p84
        $region18: #{tpu_custom_call.1} parent=11 // pred_check_branch
          %140 = sbr.rel (%p138) target = $region20
        $region19: #{tpu_custom_call.1} parent=11 // pred_region
          %s142 = ssub.s32 256, 256
          %143 = vsyncadd [#allocation6], %s142
          %s144 = sshll.u32 [#allocation7], 4
          %s145 = int_to_ptr.vmem [resolvable:$true] %s144
          %150 = dma.hbm_to_vmem [thread:$0]  %s2, 256, %s145, [#allocation6], 128, 128, 8
        $region20: #{tpu_custom_call.1} parent=11 // pred_fallthru
          _
      $region12: #{tpu_custom_call.1} parent=5 // pred_fallthru
        _
      %p151 = scmp.lt.s32.totalorder %s16, 3
      // Predicated region
      $region21: #{tpu_custom_call.1} parent=5 // pred_check
        %p152 = pneg %p151
      $region22: #{tpu_custom_call.1} parent=5 // pred_check_branch
        %154 = sbr.rel (%p152) target = $region24
      $region23: #{tpu_custom_call.1} parent=5 // pred_region
        // Predicated region
        $region25: #{tpu_custom_call.1} parent=23 // pred_check
          %p155 = pneg %p36
        $region26: #{tpu_custom_call.1} parent=23 // pred_check_branch
          %157 = sbr.rel (%p155) target = $region28
        $region27: #{tpu_custom_call.1} parent=23 // pred_region
          %s158 = sand.u32 %s26, 1
          %s159 = scalar_lea.sflag [#allocation3], %s158
          %s160 = sand.u32 %s26, 1
          %s161 = smul.addr %s160, 2
          %s162 = scalar_lea.vmem [#allocation2], %s161
          %s164 = ssub.s32 32, 32
          %165 = vsyncadd %s159, %s164
          %s166 = smul.addr %s16, 32
          %s167 = scalar_lea.hbm %s0, %s166
          %s169 = sshll.u32 %s162, 4
          %s170 = int_to_ptr.vmem [resolvable:$true] %s169
          %172 = dma.hbm_to_vmem [thread:$0]  %s167, 32, %s170, %s159
        $region28: #{tpu_custom_call.1} parent=23 // pred_fallthru
          _
      $region24: #{tpu_custom_call.1} parent=5 // pred_fallthru
        _
      %p173 = scmp.le.s32.totalorder 1, %s16
      %p174 = scmp.lt.s32.totalorder %s16, 4
      %p175 = pnand %p173, %p174
      %p176 = pneg %p175
      // Predicated region
      $region29: #{tpu_custom_call.1} parent=5 // pred_check
        _
      $region30: #{tpu_custom_call.1} parent=5 // pred_check_branch
        %178 = sbr.rel (%p175) target = $region32
      $region31: #{tpu_custom_call.1} parent=5 // pred_region
        %s179 = ssub.s32 %s16, 1
        %s180 = sand.u32 %s29, 1
        %s181 = scalar_lea.sflag [#allocation3], %s180
        %s182 = sand.u32 %s29, 1
        %s183 = smul.addr %s182, 2
        %s184 = scalar_lea.vmem [#allocation2], %s183
        // Predicated region
        $region33: #{tpu_custom_call.1} parent=31 // pred_check
          %p185 = pneg %p42
        $region34: #{tpu_custom_call.1} parent=31 // pred_check_branch
          %187 = sbr.rel (%p185) target = $region36
        $region35: #{tpu_custom_call.1} parent=31 // pred_region
          %188 = dma.done %s181, 32
        $region36: #{tpu_custom_call.1} parent=31 // pred_fallthru
          _
        // Predicated region
        $region37: #{tpu_custom_call.1} parent=31 // pred_check
          %p189 = pneg %p63
        $region38: #{tpu_custom_call.1} parent=31 // pred_check_branch
          %191 = sbr.rel (%p189) target = $region40
        $region39: #{tpu_custom_call.1} parent=31 // pred_region
          %192 = dma.done [#allocation6], 1536
        $region40: #{tpu_custom_call.1} parent=31 // pred_fallthru
          _
        // Predicated region
        $region41: #{tpu_custom_call.1} parent=31 // pred_check
          %p193 = pneg %p84
        $region42: #{tpu_custom_call.1} parent=31 // pred_check_branch
          %195 = sbr.rel (%p193) target = $region44
        $region43: #{tpu_custom_call.1} parent=31 // pred_region
          %196 = dma.done [#allocation6], 256
        $region44: #{tpu_custom_call.1} parent=31 // pred_fallthru
          _
        %s197 = sand.u32 %s29, 1
        %s198 = scalar_lea.sflag [#allocation3], %s197
        %s199 = sand.u32 %s29, 1
        %s200 = smul.addr %s199, 2
        %s201 = scalar_lea.vmem [#allocation2], %s200
        %p202 = pneg %p42
        %p203 = pneg %p39
        %p204 = pneg %p63
        %p205 = pneg %p60
        %p206 = pneg %p84
        %p207 = pneg %p81
        %p208 = pneg %p110
        %p209 = pneg %p107
        %s210 = sand.u32 %s97, 1
        %s211 = scalar_lea.sflag [#allocation4], %s210
        %s212 = sand.u32 %s97, 1
        %s213 = scalar_lea.vmem [#allocation8], %s212
        %v214 = vld [vmem:[%s184] sm:$0x3]
        %v215 = vlaneseq
        %v216 = vshrl.u32 %v215, 7
        %v217 = vadd.s32 %v216, 8
        %v218 = vadd.s32 %v216, 16
        %v219 = vadd.s32 %v216, 24
        %v220 = vadd.s32 %v216, 32
        %v221 = vadd.s32 %v216, 40
        %v222 = vadd.s32 %v216, 48
        %v223 = vadd.s32 %v216, 56
        %v224 = vadd.s32 %v216, 64
        %v225 = vadd.s32 %v216, 72
        %v226 = vadd.s32 %v216, 80
        %v227 = vadd.s32 %v216, 88
        %v228 = vadd.s32 %v216, 96
        %v229 = vadd.s32 %v216, 104
        %v230 = vadd.s32 %v216, 112
        %v231 = vadd.s32 %v216, 120
        %v232 = vadd.s32 %v216, 128
        %v233 = vadd.s32 %v216, 136
        %v234 = vadd.s32 %v216, 144
        %v235 = vadd.s32 %v216, 152
        %v236 = vadd.s32 %v216, 160
        %v237 = vadd.s32 %v216, 168
        %v238 = vadd.s32 %v216, 176
        %v239 = vadd.s32 %v216, 184
        %v240 = vadd.s32 %v216, 192
        %v241 = vadd.s32 %v216, 200
        %v242 = vadd.s32 %v216, 208
        %v243 = vadd.s32 %v216, 216
        %v244 = vadd.s32 %v216, 224
        %v245 = vadd.s32 %v216, 232
        %v246 = vadd.s32 %v216, 240
        %v247 = vadd.s32 %v216, 248
        %v248 = vadd.s32 %v216, 256
        %v249 = vadd.s32 %v216, 264
        %v250 = vadd.s32 %v216, 272
        %v251 = vadd.s32 %v216, 280
        %v252 = vadd.s32 %v216, 288
        %v253 = vadd.s32 %v216, 296
        %v254 = vadd.s32 %v216, 304
        %v255 = vadd.s32 %v216, 312
        %v256 = vadd.s32 %v216, 320
        %v257 = vadd.s32 %v216, 328
        %v258 = vadd.s32 %v216, 336
        %v259 = vadd.s32 %v216, 344
        %v260 = vadd.s32 %v216, 352
        %v261 = vadd.s32 %v216, 360
        %v262 = vadd.s32 %v216, 368
        %v263 = vadd.s32 %v216, 376
        %v264 = vlaneseq
        %v265 = vshrl.u32 %v264, 7
        %v266 = vsub.s32 0, %v265
        %v267 = vrot.slane %v214, %v266
        %vm268 = vcmp.eq.s32.totalorder %v216, %v267
        %vm269 = vcmp.eq.s32.totalorder %v217, %v267
        %vm270 = vcmp.eq.s32.totalorder %v218, %v267
        %vm271 = vcmp.eq.s32.totalorder %v219, %v267
        %vm272 = vcmp.eq.s32.totalorder %v220, %v267
        %vm273 = vcmp.eq.s32.totalorder %v221, %v267
        %vm274 = vcmp.eq.s32.totalorder %v222, %v267
        %vm275 = vcmp.eq.s32.totalorder %v223, %v267
        %vm276 = vcmp.eq.s32.totalorder %v224, %v267
        %vm277 = vcmp.eq.s32.totalorder %v225, %v267
        %vm278 = vcmp.eq.s32.totalorder %v226, %v267
        %vm279 = vcmp.eq.s32.totalorder %v227, %v267
        %vm280 = vcmp.eq.s32.totalorder %v228, %v267
        %vm281 = vcmp.eq.s32.totalorder %v229, %v267
        %vm282 = vcmp.eq.s32.totalorder %v230, %v267
        %vm283 = vcmp.eq.s32.totalorder %v231, %v267
        %vm284 = vcmp.eq.s32.totalorder %v232, %v267
        %vm285 = vcmp.eq.s32.totalorder %v233, %v267
        %vm286 = vcmp.eq.s32.totalorder %v234, %v267
        %vm287 = vcmp.eq.s32.totalorder %v235, %v267
        %vm288 = vcmp.eq.s32.totalorder %v236, %v267
        %vm289 = vcmp.eq.s32.totalorder %v237, %v267
        %vm290 = vcmp.eq.s32.totalorder %v238, %v267
        %vm291 = vcmp.eq.s32.totalorder %v239, %v267
        %vm292 = vcmp.eq.s32.totalorder %v240, %v267
        %vm293 = vcmp.eq.s32.totalorder %v241, %v267
        %vm294 = vcmp.eq.s32.totalorder %v242, %v267
        %vm295 = vcmp.eq.s32.totalorder %v243, %v267
        %vm296 = vcmp.eq.s32.totalorder %v244, %v267
        %vm297 = vcmp.eq.s32.totalorder %v245, %v267
        %vm298 = vcmp.eq.s32.totalorder %v246, %v267
        %vm299 = vcmp.eq.s32.totalorder %v247, %v267
        %vm300 = vcmp.eq.s32.totalorder %v248, %v267
        %vm301 = vcmp.eq.s32.totalorder %v249, %v267
        %vm302 = vcmp.eq.s32.totalorder %v250, %v267
        %vm303 = vcmp.eq.s32.totalorder %v251, %v267
        %vm304 = vcmp.eq.s32.totalorder %v252, %v267
        %vm305 = vcmp.eq.s32.totalorder %v253, %v267
        %vm306 = vcmp.eq.s32.totalorder %v254, %v267
        %vm307 = vcmp.eq.s32.totalorder %v255, %v267
        %vm308 = vcmp.eq.s32.totalorder %v256, %v267
        %vm309 = vcmp.eq.s32.totalorder %v257, %v267
        %vm310 = vcmp.eq.s32.totalorder %v258, %v267
        %vm311 = vcmp.eq.s32.totalorder %v259, %v267
        %vm312 = vcmp.eq.s32.totalorder %v260, %v267
        %vm313 = vcmp.eq.s32.totalorder %v261, %v267
        %vm314 = vcmp.eq.s32.totalorder %v262, %v267
        %vm315 = vcmp.eq.s32.totalorder %v263, %v267
        %v316 = vlaneseq
        %v317 = vshrl.u32 %v316, 7
        %v318 = vsub.s32 1, %v317
        %v319 = vrot.slane %v214, %v318
        %vm320 = vcmp.eq.s32.totalorder %v216, %v319
        %vm321 = vcmp.eq.s32.totalorder %v217, %v319
        %vm322 = vcmp.eq.s32.totalorder %v218, %v319
        %vm323 = vcmp.eq.s32.totalorder %v219, %v319
        %vm324 = vcmp.eq.s32.totalorder %v220, %v319
        %vm325 = vcmp.eq.s32.totalorder %v221, %v319
        %vm326 = vcmp.eq.s32.totalorder %v222, %v319
        %vm327 = vcmp.eq.s32.totalorder %v223, %v319
        %vm328 = vcmp.eq.s32.totalorder %v224, %v319
        %vm329 = vcmp.eq.s32.totalorder %v225, %v319
        %vm330 = vcmp.eq.s32.totalorder %v226, %v319
        %vm331 = vcmp.eq.s32.totalorder %v227, %v319
        %vm332 = vcmp.eq.s32.totalorder %v228, %v319
        %vm333 = vcmp.eq.s32.totalorder %v229, %v319
        %vm334 = vcmp.eq.s32.totalorder %v230, %v319
        %vm335 = vcmp.eq.s32.totalorder %v231, %v319
        %vm336 = vcmp.eq.s32.totalorder %v232, %v319
        %vm337 = vcmp.eq.s32.totalorder %v233, %v319
        %vm338 = vcmp.eq.s32.totalorder %v234, %v319
        %vm339 = vcmp.eq.s32.totalorder %v235, %v319
        %vm340 = vcmp.eq.s32.totalorder %v236, %v319
        %vm341 = vcmp.eq.s32.totalorder %v237, %v319
        %vm342 = vcmp.eq.s32.totalorder %v238, %v319
        %vm343 = vcmp.eq.s32.totalorder %v239, %v319
        %vm344 = vcmp.eq.s32.totalorder %v240, %v319
        %vm345 = vcmp.eq.s32.totalorder %v241, %v319
        %vm346 = vcmp.eq.s32.totalorder %v242, %v319
        %vm347 = vcmp.eq.s32.totalorder %v243, %v319
        %vm348 = vcmp.eq.s32.totalorder %v244, %v319
        %vm349 = vcmp.eq.s32.totalorder %v245, %v319
        %vm350 = vcmp.eq.s32.totalorder %v246, %v319
        %vm351 = vcmp.eq.s32.totalorder %v247, %v319
        %vm352 = vcmp.eq.s32.totalorder %v248, %v319
        %vm353 = vcmp.eq.s32.totalorder %v249, %v319
        %vm354 = vcmp.eq.s32.totalorder %v250, %v319
        %vm355 = vcmp.eq.s32.totalorder %v251, %v319
        %vm356 = vcmp.eq.s32.totalorder %v252, %v319
        %vm357 = vcmp.eq.s32.totalorder %v253, %v319
        %vm358 = vcmp.eq.s32.totalorder %v254, %v319
        %vm359 = vcmp.eq.s32.totalorder %v255, %v319
        %vm360 = vcmp.eq.s32.totalorder %v256, %v319
        %vm361 = vcmp.eq.s32.totalorder %v257, %v319
        %vm362 = vcmp.eq.s32.totalorder %v258, %v319
        %vm363 = vcmp.eq.s32.totalorder %v259, %v319
        %vm364 = vcmp.eq.s32.totalorder %v260, %v319
        %vm365 = vcmp.eq.s32.totalorder %v261, %v319
        %vm366 = vcmp.eq.s32.totalorder %v262, %v319
        %vm367 = vcmp.eq.s32.totalorder %v263, %v319
        %vm368 = vmor %vm268, %vm320
        %vm369 = vmor %vm269, %vm321
        %vm370 = vmor %vm270, %vm322
        %vm371 = vmor %vm271, %vm323
        %vm372 = vmor %vm272, %vm324
        %vm373 = vmor %vm273, %vm325
        %vm374 = vmor %vm274, %vm326
        %vm375 = vmor %vm275, %vm327
        %vm376 = vmor %vm276, %vm328
        %vm377 = vmor %vm277, %vm329
        %vm378 = vmor %vm278, %vm330
        %vm379 = vmor %vm279, %vm331
        %vm380 = vmor %vm280, %vm332
        %vm381 = vmor %vm281, %vm333
        %vm382 = vmor %vm282, %vm334
        %vm383 = vmor %vm283, %vm335
        %vm384 = vmor %vm284, %vm336
        %vm385 = vmor %vm285, %vm337
        %vm386 = vmor %vm286, %vm338
        %vm387 = vmor %vm287, %vm339
        %vm388 = vmor %vm288, %vm340
        %vm389 = vmor %vm289, %vm341
        %vm390 = vmor %vm290, %vm342
        %vm391 = vmor %vm291, %vm343
        %vm392 = vmor %vm292, %vm344
        %vm393 = vmor %vm293, %vm345
        %vm394 = vmor %vm294, %vm346
        %vm395 = vmor %vm295, %vm347
        %vm396 = vmor %vm296, %vm348
        %vm397 = vmor %vm297, %vm349
        %vm398 = vmor %vm298, %vm350
        %vm399 = vmor %vm299, %vm351
        %vm400 = vmor %vm300, %vm352
        %vm401 = vmor %vm301, %vm353
        %vm402 = vmor %vm302, %vm354
        %vm403 = vmor %vm303, %vm355
        %vm404 = vmor %vm304, %vm356
        %vm405 = vmor %vm305, %vm357
        %vm406 = vmor %vm306, %vm358
        %vm407 = vmor %vm307, %vm359
        %vm408 = vmor %vm308, %vm360
        %vm409 = vmor %vm309, %vm361
        %vm410 = vmor %vm310, %vm362
        %vm411 = vmor %vm311, %vm363
        %vm412 = vmor %vm312, %vm364
        %vm413 = vmor %vm313, %vm365
        %vm414 = vmor %vm314, %vm366
        %vm415 = vmor %vm315, %vm367
        %v416 = vsel %vm368, 1, 0
        %v417 = vsel %vm369, 1, 0
        %v418 = vsel %vm370, 1, 0
        %v419 = vsel %vm371, 1, 0
        %v420 = vsel %vm372, 1, 0
        %v421 = vsel %vm373, 1, 0
        %v422 = vsel %vm374, 1, 0
        %v423 = vsel %vm375, 1, 0
        %v424 = vsel %vm376, 1, 0
        %v425 = vsel %vm377, 1, 0
        %v426 = vsel %vm378, 1, 0
        %v427 = vsel %vm379, 1, 0
        %v428 = vsel %vm380, 1, 0
        %v429 = vsel %vm381, 1, 0
        %v430 = vsel %vm382, 1, 0
        %v431 = vsel %vm383, 1, 0
        %v432 = vsel %vm384, 1, 0
        %v433 = vsel %vm385, 1, 0
        %v434 = vsel %vm386, 1, 0
        %v435 = vsel %vm387, 1, 0
        %v436 = vsel %vm388, 1, 0
        %v437 = vsel %vm389, 1, 0
        %v438 = vsel %vm390, 1, 0
        %v439 = vsel %vm391, 1, 0
        %v440 = vsel %vm392, 1, 0
        %v441 = vsel %vm393, 1, 0
        %v442 = vsel %vm394, 1, 0
        %v443 = vsel %vm395, 1, 0
        %v444 = vsel %vm396, 1, 0
        %v445 = vsel %vm397, 1, 0
        %v446 = vsel %vm398, 1, 0
        %v447 = vsel %vm399, 1, 0
        %v448 = vsel %vm400, 1, 0
        %v449 = vsel %vm401, 1, 0
        %v450 = vsel %vm402, 1, 0
        %v451 = vsel %vm403, 1, 0
        %v452 = vsel %vm404, 1, 0
        %v453 = vsel %vm405, 1, 0
        %v454 = vsel %vm406, 1, 0
        %v455 = vsel %vm407, 1, 0
        %v456 = vsel %vm408, 1, 0
        %v457 = vsel %vm409, 1, 0
        %v458 = vsel %vm410, 1, 0
        %v459 = vsel %vm411, 1, 0
        %v460 = vsel %vm412, 1, 0
        %v461 = vsel %vm413, 1, 0
        %v462 = vsel %vm414, 1, 0
        %v463 = vsel %vm415, 1, 0
        %v464 = vcvt.s32.f32 %v416
        %v465 = vcvt.s32.f32 %v417
        %v466 = vcvt.s32.f32 %v418
        %v467 = vcvt.s32.f32 %v419
        %v468 = vcvt.s32.f32 %v420
        %v469 = vcvt.s32.f32 %v421
        %v470 = vcvt.s32.f32 %v422
        %v471 = vcvt.s32.f32 %v423
        %v472 = vcvt.s32.f32 %v424
        %v473 = vcvt.s32.f32 %v425
        %v474 = vcvt.s32.f32 %v426
        %v475 = vcvt.s32.f32 %v427
        %v476 = vcvt.s32.f32 %v428
        %v477 = vcvt.s32.f32 %v429
        %v478 = vcvt.s32.f32 %v430
        %v479 = vcvt.s32.f32 %v431
        %v480 = vcvt.s32.f32 %v432
        %v481 = vcvt.s32.f32 %v433
        %v482 = vcvt.s32.f32 %v434
        %v483 = vcvt.s32.f32 %v435
        %v484 = vcvt.s32.f32 %v436
        %v485 = vcvt.s32.f32 %v437
        %v486 = vcvt.s32.f32 %v438
        %v487 = vcvt.s32.f32 %v439
        %v488 = vcvt.s32.f32 %v440
        %v489 = vcvt.s32.f32 %v441
        %v490 = vcvt.s32.f32 %v442
        %v491 = vcvt.s32.f32 %v443
        %v492 = vcvt.s32.f32 %v444
        %v493 = vcvt.s32.f32 %v445
        %v494 = vcvt.s32.f32 %v446
        %v495 = vcvt.s32.f32 %v447
        %v496 = vcvt.s32.f32 %v448
        %v497 = vcvt.s32.f32 %v449
        %v498 = vcvt.s32.f32 %v450
        %v499 = vcvt.s32.f32 %v451
        %v500 = vcvt.s32.f32 %v452
        %v501 = vcvt.s32.f32 %v453
        %v502 = vcvt.s32.f32 %v454
        %v503 = vcvt.s32.f32 %v455
        %v504 = vcvt.s32.f32 %v456
        %v505 = vcvt.s32.f32 %v457
        %v506 = vcvt.s32.f32 %v458
        %v507 = vcvt.s32.f32 %v459
        %v508 = vcvt.s32.f32 %v460
        %v509 = vcvt.s32.f32 %v461
        %v510 = vcvt.s32.f32 %v462
        %v511 = vcvt.s32.f32 %v463
        %v512 = vld [vmem:[#allocation5] sm:$0xff]
        %v513 = vld [vmem:[#allocation5 + $0x8] sm:$0xff]
        %v514 = vld [vmem:[#allocation5 + $0x10] sm:$0xff]
        %v515 = vld [vmem:[#allocation5 + $0x18] sm:$0xff]
        %v516 = vld [vmem:[#allocation5 + $0x20] sm:$0xff]
        %v517 = vld [vmem:[#allocation5 + $0x28] sm:$0xff]
        %v518 = vld [vmem:[#allocation5 + $0x30] sm:$0xff]
        %v519 = vld [vmem:[#allocation5 + $0x38] sm:$0xff]
        %v520 = vld [vmem:[#allocation5 + $0x40] sm:$0xff]
        %v521 = vld [vmem:[#allocation5 + $0x48] sm:$0xff]
        %v522 = vld [vmem:[#allocation5 + $0x50] sm:$0xff]
        %v523 = vld [vmem:[#allocation5 + $0x58] sm:$0xff]
        %524 = vmatprep.subr.mxu0 0.0
        %525 = vmatpush1.msra.mxu0 %v464
        %526 = vmatprep.subr.mxu0 0.0
        %527 = vmatpush1.msra.mxu0 %v465
        %528 = vmatprep.subr.mxu0 0.0
        %529 = vmatpush1.msra.mxu0 %v466
        %530 = vmatprep.subr.mxu0 0.0
        %531 = vmatpush1.msra.mxu0 %v467
        %532 = vmatprep.subr.mxu0 0.0
        %533 = vmatpush1.msra.mxu0 %v468
        %534 = vmatprep.subr.mxu0 0.0
        %535 = vmatpush1.msra.mxu0 %v469
        %536 = vmatprep.subr.mxu0 0.0
        %537 = vmatpush1.msra.mxu0 %v470
        %538 = vmatprep.subr.mxu0 0.0
        %539 = vmatpush1.msra.mxu0 %v471
        %540 = vmatprep.subr.mxu0 0.0
        %541 = vmatpush1.msra.mxu0 %v472
        %542 = vmatprep.subr.mxu0 0.0
        %543 = vmatpush1.msra.mxu0 %v473
        %544 = vmatprep.subr.mxu0 0.0
        %545 = vmatpush1.msra.mxu0 %v474
        %546 = vmatprep.subr.mxu0 0.0
        %547 = vmatpush1.msra.mxu0 %v475
        %548 = vmatprep.subr.mxu0 0.0
        %549 = vmatpush1.msra.mxu0 %v476
        %550 = vmatprep.subr.mxu0 0.0
        %551 = vmatpush1.msra.mxu0 %v477
        %552 = vmatprep.subr.mxu0 0.0
        %553 = vmatpush1.msra.mxu0 %v478
        %554 = vmatprep.subr.mxu0 0.0
        %555 = vmatpush1.msra.mxu0 %v479
        %556 = vmatprep.subr.mxu0 0.0
        %557 = vmatpush1.msra.mxu0 %v480
        %558 = vmatprep.subr.mxu0 0.0
        %559 = vmatpush1.msra.mxu0 %v481
        %560 = vmatprep.subr.mxu0 0.0
        %561 = vmatpush1.msra.mxu0 %v482
        %562 = vmatprep.subr.mxu0 0.0
        %563 = vmatpush1.msra.mxu0 %v483
        %564 = vmatprep.subr.mxu0 0.0
        %565 = vmatpush1.msra.mxu0 %v484
        %566 = vmatprep.subr.mxu0 0.0
        %567 = vmatpush1.msra.mxu0 %v485
        %568 = vmatprep.subr.mxu0 0.0
        %569 = vmatpush1.msra.mxu0 %v486
        %570 = vmatprep.subr.mxu0 0.0
        %571 = vmatpush1.msra.mxu0 %v487
        %572 = vmatprep.subr.mxu0 0.0
        %573 = vmatpush1.msra.mxu0 %v488
        %574 = vmatprep.subr.mxu0 0.0
        %575 = vmatpush1.msra.mxu0 %v489
        %576 = vmatprep.subr.mxu0 0.0
        %577 = vmatpush1.msra.mxu0 %v490
        %578 = vmatprep.subr.mxu0 0.0
        %579 = vmatpush1.msra.mxu0 %v491
        %580 = vmatprep.subr.mxu0 0.0
        %581 = vmatpush1.msra.mxu0 %v492
        %582 = vmatprep.subr.mxu0 0.0
        %583 = vmatpush1.msra.mxu0 %v493
        %584 = vmatprep.subr.mxu0 0.0
        %585 = vmatpush1.msra.mxu0 %v494
        %586 = vmatprep.subr.mxu0 0.0
        %587 = vmatpush1.msra.mxu0 %v495
        %588 = vmatprep.mubr.f32.mxu0 %v513
        %589 = vmatmul.mubr.f32.gmra.mrb[0].mxu0 %v512
        %v590 = vpop.f32.mrb[0].mxu0
        %v591 = vadd.f32 0.0, %v590
        %v592 = vpop.f32.mrb[0].mxu0
        %593 = vmatprep.mubr.f32.mxu0 %v516
        %594 = vmatmul.mubr.f32.gmra.mrb[0].mxu0 %v515
        %v595 = vpop.f32.mrb[0].mxu0
        %v596 = vadd.f32 0.0, %v595
        %v597 = vpop.f32.mrb[0].mxu0
        %598 = vmatprep.mubr.f32.mxu0 %v519
        %599 = vmatmul.mubr.f32.gmra.mrb[0].mxu0 %v518
        %v600 = vpop.f32.mrb[0].mxu0
        %v601 = vadd.f32 0.0, %v600
        %v602 = vpop.f32.mrb[0].mxu0
        %603 = vmatprep.mubr.f32.mxu0 %v522
        %604 = vmatmul.mubr.f32.gmra.mrb[0].mxu0 %v521
        %v605 = vpop.f32.mrb[0].mxu0
        %v606 = vadd.f32 0.0, %v605
        %v607 = vpop.f32.mrb[0].mxu0
        %608 = vdwg.mxu0
        %609 = vmatprep.subr.mxu0 0.0
        %610 = vmatpush1.msra.mxu0 %v496
        %611 = vmatprep.subr.mxu0 0.0
        %612 = vmatpush1.msra.mxu0 %v497
        %613 = vmatprep.subr.mxu0 0.0
        %614 = vmatpush1.msra.mxu0 %v498
        %615 = vmatprep.subr.mxu0 0.0
        %616 = vmatpush1.msra.mxu0 %v499
        %617 = vmatprep.subr.mxu0 0.0
        %618 = vmatpush1.msra.mxu0 %v500
        %619 = vmatprep.subr.mxu0 0.0
        %620 = vmatpush1.msra.mxu0 %v501
        %621 = vmatprep.subr.mxu0 0.0
        %622 = vmatpush1.msra.mxu0 %v502
        %623 = vmatprep.subr.mxu0 0.0
        %624 = vmatpush1.msra.mxu0 %v503
        %625 = vmatprep.subr.mxu0 0.0
        %626 = vmatpush1.msra.mxu0 %v504
        %627 = vmatprep.subr.mxu0 0.0
        %628 = vmatpush1.msra.mxu0 %v505
        %629 = vmatprep.subr.mxu0 0.0
        %630 = vmatpush1.msra.mxu0 %v506
        %631 = vmatprep.subr.mxu0 0.0
        %632 = vmatpush1.msra.mxu0 %v507
        %633 = vmatprep.subr.mxu0 0.0
        %634 = vmatpush1.msra.mxu0 %v508
        %635 = vmatprep.subr.mxu0 0.0
        %636 = vmatpush1.msra.mxu0 %v509
        %637 = vmatprep.subr.mxu0 0.0
        %638 = vmatpush1.msra.mxu0 %v510
        %639 = vmatprep.subr.mxu0 0.0
        %640 = vmatpush1.msra.mxu0 %v511
        %641 = vmatprep.subr.mxu0 0.0
        %642 = vmatpush1.msra.mxu0 0.0
        %643 = vmatprep.subr.mxu0 0.0
        %644 = vmatpush1.msra.mxu0 0.0
        %645 = vmatprep.subr.mxu0 0.0
        %646 = vmatpush1.msra.mxu0 0.0
        %647 = vmatprep.subr.mxu0 0.0
        %648 = vmatpush1.msra.mxu0 0.0
        %649 = vmatprep.subr.mxu0 0.0
        %650 = vmatpush1.msra.mxu0 0.0
        %651 = vmatprep.subr.mxu0 0.0
        %652 = vmatpush1.msra.mxu0 0.0
        %653 = vmatprep.subr.mxu0 0.0
        %654 = vmatpush1.msra.mxu0 0.0
        %655 = vmatprep.subr.mxu0 0.0
        %656 = vmatpush1.msra.mxu0 0.0
        %657 = vmatprep.subr.mxu0 0.0
        %658 = vmatpush1.msra.mxu0 0.0
        %659 = vmatprep.subr.mxu0 0.0
        %660 = vmatpush1.msra.mxu0 0.0
        %661 = vmatprep.subr.mxu0 0.0
        %662 = vmatpush1.msra.mxu0 0.0
        %663 = vmatprep.subr.mxu0 0.0
        %664 = vmatpush1.msra.mxu0 0.0
        %665 = vmatprep.subr.mxu0 0.0
        %666 = vmatpush1.msra.mxu0 0.0
        %667 = vmatprep.subr.mxu0 0.0
        %668 = vmatpush1.msra.mxu0 0.0
        %669 = vmatprep.subr.mxu0 0.0
        %670 = vmatpush1.msra.mxu0 0.0
        %671 = vmatprep.subr.mxu0 0.0
        %672 = vmatpush1.msra.mxu0 0.0
        %673 = vmatprep.mubr.f32.mxu0 0.0
        %674 = vmatmul.mubr.f32.gmra.mrb[0].mxu0 %v514
        %v675 = vpop.f32.mrb[0].mxu0
        %v676 = vadd.f32 %v591, %v675
        %v677 = vpop.f32.mrb[0].mxu0
        %678 = vmatprep.mubr.f32.mxu0 0.0
        %679 = vmatmul.mubr.f32.gmra.mrb[0].mxu0 %v517
        %v680 = vpop.f32.mrb[0].mxu0
        %v681 = vadd.f32 %v596, %v680
        %v682 = vpop.f32.mrb[0].mxu0
        %683 = vmatprep.mubr.f32.mxu0 0.0
        %684 = vmatmul.mubr.f32.gmra.mrb[0].mxu0 %v520
        %v685 = vpop.f32.mrb[0].mxu0
        %v686 = vadd.f32 %v601, %v685
        %v687 = vpop.f32.mrb[0].mxu0
        %688 = vmatprep.mubr.f32.mxu0 0.0
        %689 = vmatmul.mubr.f32.gmra.mrb[0].mxu0 %v523
        %v690 = vpop.f32.mrb[0].mxu0
        %v691 = vadd.f32 %v606, %v690
        %v692 = vpop.f32.mrb[0].mxu0
        %693 = vdwg.mxu0
        %v694 = vmax.f32 %v676, 0.0
        %v695 = vmax.f32 %v681, 0.0
        %v696 = vmax.f32 %v686, 0.0
        %v697 = vmax.f32 %v691, 0.0
        %v698 = vld [vmem:[#allocation7] sm:$0xff]
        %v699 = vld [vmem:[#allocation7 + $0x8] sm:$0xff]
        %701 = vset.pattern.permute.xlu0 48
        %702 = vperm.xlu0 %701, %v698
        %v703 = vpop.permute.xlu0 %702
        %706 = vset.pattern.permute.xlu0 48
        %707 = vperm.xlu0 %706, %v699
        %v708 = vpop.permute.xlu0 %707
        %vm710 = vcmask 261120
        %v711 = vsel %vm710, %v698, 0
        %v713 = vsel %vm710, %v699, 0
        %715 = vmatprep.subr.mxu0 0.0
        %716 = vmatpush1.msra.mxu0 %v694
        %717 = vmatprep.subr.mxu0 0.0
        %718 = vmatpush1.msra.mxu0 %v695
        %719 = vmatprep.subr.mxu0 0.0
        %720 = vmatpush1.msra.mxu0 %v696
        %721 = vmatprep.subr.mxu0 0.0
        %722 = vmatpush1.msra.mxu0 %v697
        %723 = vmatprep.subr.mxu0 0.0
        %724 = vmatpush1.msra.mxu0 0.0
        %725 = vmatprep.subr.mxu0 0.0
        %726 = vmatpush1.msra.mxu0 0.0
        %727 = vmatprep.subr.mxu0 0.0
        %728 = vmatpush1.msra.mxu0 0.0
        %729 = vmatprep.subr.mxu0 0.0
        %730 = vmatpush1.msra.mxu0 0.0
        %731 = vmatprep.subr.mxu0 0.0
        %732 = vmatpush1.msra.mxu0 0.0
        %733 = vmatprep.subr.mxu0 0.0
        %734 = vmatpush1.msra.mxu0 0.0
        %735 = vmatprep.subr.mxu0 0.0
        %736 = vmatpush1.msra.mxu0 0.0
        %737 = vmatprep.subr.mxu0 0.0
        %738 = vmatpush1.msra.mxu0 0.0
        %739 = vmatprep.subr.mxu0 0.0
        %740 = vmatpush1.msra.mxu0 0.0
        %741 = vmatprep.subr.mxu0 0.0
        %742 = vmatpush1.msra.mxu0 0.0
        %743 = vmatprep.subr.mxu0 0.0
        %744 = vmatpush1.msra.mxu0 0.0
        %745 = vmatprep.subr.mxu0 0.0
        %746 = vmatpush1.msra.mxu0 0.0
        %747 = vmatprep.subr.mxu0 0.0
        %748 = vmatpush1.msra.mxu0 0.0
        %749 = vmatprep.subr.mxu0 0.0
        %750 = vmatpush1.msra.mxu0 0.0
        %751 = vmatprep.subr.mxu0 0.0
        %752 = vmatpush1.msra.mxu0 0.0
        %753 = vmatprep.subr.mxu0 0.0
        %754 = vmatpush1.msra.mxu0 0.0
        %755 = vmatprep.subr.mxu0 0.0
        %756 = vmatpush1.msra.mxu0 0.0
        %757 = vmatprep.subr.mxu0 0.0
        %758 = vmatpush1.msra.mxu0 0.0
        %759 = vmatprep.subr.mxu0 0.0
        %760 = vmatpush1.msra.mxu0 0.0
        %761 = vmatprep.subr.mxu0 0.0
        %762 = vmatpush1.msra.mxu0 0.0
        %763 = vmatprep.subr.mxu0 0.0
        %764 = vmatpush1.msra.mxu0 0.0
        %765 = vmatprep.subr.mxu0 0.0
        %766 = vmatpush1.msra.mxu0 0.0
        %767 = vmatprep.subr.mxu0 0.0
        %768 = vmatpush1.msra.mxu0 0.0
        %769 = vmatprep.subr.mxu0 0.0
        %770 = vmatpush1.msra.mxu0 0.0
        %771 = vmatprep.subr.mxu0 0.0
        %772 = vmatpush1.msra.mxu0 0.0
        %773 = vmatprep.subr.mxu0 0.0
        %774 = vmatpush1.msra.mxu0 0.0
        %775 = vmatprep.subr.mxu0 0.0
        %776 = vmatpush1.msra.mxu0 0.0
        %777 = vmatprep.subr.mxu0 0.0
        %778 = vmatpush1.msra.mxu0 0.0
        %779 = vmatprep.mubr.f32.mxu0 0.0
        %780 = vmatmul.mubr.f32.gmra.mrb[0].mxu0 %v711
        %v781 = vpop.f32.mrb[0].mxu0
        %v782 = vadd.f32 %v703, %v781
        %v783 = vpop.f32.mrb[0].mxu0
        %784 = vmatprep.mubr.f32.mxu0 0.0
        %785 = vmatmul.mubr.f32.gmra.mrb[0].mxu0 %v713
        %v786 = vpop.f32.mrb[0].mxu0
        %v787 = vadd.f32 %v708, %v786
        %v788 = vpop.f32.mrb[0].mxu0
        %789 = vdwg.mxu0
        %v790 = vmax.f32 %v782, 0.0
        %v791 = vmax.f32 %v787, 0.0
        %792 = vset.pattern.permute.xlu0 49
        %793 = vperm.xlu0 %792, %v698
        %v794 = vpop.permute.xlu0 %793
        %796 = vrot.lane.b32.xlu0 %v698, 96
        %v797 = vpop.permute.xlu0 %796
        %vm798 = vcmask 130048
        %v799 = vsel %vm798, %v797, 0
        %801 = vmatprep.subr.mxu0 0.0
        %802 = vmatpush1.msra.mxu0 %v790
        %803 = vmatprep.subr.mxu0 0.0
        %804 = vmatpush1.msra.mxu0 %v791
        %805 = vmatprep.subr.mxu0 0.0
        %806 = vmatpush1.msra.mxu0 0.0
        %807 = vmatprep.subr.mxu0 0.0
        %808 = vmatpush1.msra.mxu0 0.0
        %809 = vmatprep.subr.mxu0 0.0
        %810 = vmatpush1.msra.mxu0 0.0
        %811 = vmatprep.subr.mxu0 0.0
        %812 = vmatpush1.msra.mxu0 0.0
        %813 = vmatprep.subr.mxu0 0.0
        %814 = vmatpush1.msra.mxu0 0.0
        %815 = vmatprep.subr.mxu0 0.0
        %816 = vmatpush1.msra.mxu0 0.0
        %817 = vmatprep.subr.mxu0 0.0
        %818 = vmatpush1.msra.mxu0 0.0
        %819 = vmatprep.subr.mxu0 0.0
        %820 = vmatpush1.msra.mxu0 0.0
        %821 = vmatprep.subr.mxu0 0.0
        %822 = vmatpush1.msra.mxu0 0.0
        %823 = vmatprep.subr.mxu0 0.0
        %824 = vmatpush1.msra.mxu0 0.0
        %825 = vmatprep.subr.mxu0 0.0
        %826 = vmatpush1.msra.mxu0 0.0
        %827 = vmatprep.subr.mxu0 0.0
        %828 = vmatpush1.msra.mxu0 0.0
        %829 = vmatprep.subr.mxu0 0.0
        %830 = vmatpush1.msra.mxu0 0.0
        %831 = vmatprep.subr.mxu0 0.0
        %832 = vmatpush1.msra.mxu0 0.0
        %833 = vmatprep.subr.mxu0 0.0
        %834 = vmatpush1.msra.mxu0 0.0
        %835 = vmatprep.subr.mxu0 0.0
        %836 = vmatpush1.msra.mxu0 0.0
        %837 = vmatprep.subr.mxu0 0.0
        %838 = vmatpush1.msra.mxu0 0.0
        %839 = vmatprep.subr.mxu0 0.0
        %840 = vmatpush1.msra.mxu0 0.0
        %841 = vmatprep.subr.mxu0 0.0
        %842 = vmatpush1.msra.mxu0 0.0
        %843 = vmatprep.subr.mxu0 0.0
        %844 = vmatpush1.msra.mxu0 0.0
        %845 = vmatprep.subr.mxu0 0.0
        %846 = vmatpush1.msra.mxu0 0.0
        %847 = vmatprep.subr.mxu0 0.0
        %848 = vmatpush1.msra.mxu0 0.0
        %849 = vmatprep.subr.mxu0 0.0
        %850 = vmatpush1.msra.mxu0 0.0
        %851 = vmatprep.subr.mxu0 0.0
        %852 = vmatpush1.msra.mxu0 0.0
        %853 = vmatprep.subr.mxu0 0.0
        %854 = vmatpush1.msra.mxu0 0.0
        %855 = vmatprep.subr.mxu0 0.0
        %856 = vmatpush1.msra.mxu0 0.0
        %857 = vmatprep.subr.mxu0 0.0
        %858 = vmatpush1.msra.mxu0 0.0
        %859 = vmatprep.subr.mxu0 0.0
        %860 = vmatpush1.msra.mxu0 0.0
        %861 = vmatprep.subr.mxu0 0.0
        %862 = vmatpush1.msra.mxu0 0.0
        %863 = vmatprep.subr.mxu0 0.0
        %864 = vmatpush1.msra.mxu0 0.0
        %865 = vmatprep.mubr.f32.mxu0 0.0
        %866 = vmatmul.mubr.f32.gmra.mrb[0].mxu0 %v799
        %v867 = vpop.f32.mrb[0].mxu0
        %v868 = vadd.f32 %v794, %v867
        %v869 = vpop.f32.mrb[0].mxu0
        %870 = vdwg.mxu0
        %v871 = vmax.f32 %v868, 0.0
        %872 = vset.pattern.permute.xlu0 50
        %873 = vperm.xlu0 %872, %v698
        %v874 = vpop.permute.xlu0 %873
        %v876 = vmul.f32 %v871, %v874
        %v877 = vrot.slane %v876, 4
        %v878 = vadd.f32 %v876, %v877
        %v879 = vrot.slane %v878, 2
        %v880 = vadd.f32 %v878, %v879
        %v881 = vrot.slane %v880, 1
        %v882 = vadd.f32 %v880, %v881
        %883 = vset.pattern.permute.xlu0 51
        %884 = vperm.xlu0 %883, %v698
        %v885 = vpop.permute.xlu0 %884
        %v887 = vadd.f32 %v882, %v885
        %888 = vst [vmem:[%s213] sm:$0x1] %v887
        %s889 = sand.u32 %s97, 1
        %s890 = scalar_lea.sflag [#allocation4], %s889
        %s891 = sand.u32 %s97, 1
        %s892 = scalar_lea.vmem [#allocation8], %s891
        // Predicated region
        $region45: #{tpu_custom_call.1} parent=31 // pred_check
          %p893 = pneg %p107
        $region46: #{tpu_custom_call.1} parent=31 // pred_check_branch
          %895 = sbr.rel (%p893) target = $region48
        $region47: #{tpu_custom_call.1} parent=31 // pred_region
          %s897 = ssub.s32 16, 16
          %898 = vsyncadd %s890, %s897
          %s899 = smul.addr %s21, 16
          %s900 = scalar_lea.hbm %s3, %s899
          %s902 = sshll.u32 %s892, 4
          %s903 = int_to_ptr.vmem [resolvable:$true] %s902
          %905 = dma.vmem_to_hbm [thread:$0]  %s903, 16, %s900, %s890
        $region48: #{tpu_custom_call.1} parent=31 // pred_fallthru
          _
      $region32: #{tpu_custom_call.1} parent=5 // pred_fallthru
        _
      %p906 = scmp.le.s32.totalorder 2, %s16
      // Predicated region
      $region49: #{tpu_custom_call.1} parent=5 // pred_check
        %p907 = pneg %p906
      $region50: #{tpu_custom_call.1} parent=5 // pred_check_branch
        %909 = sbr.rel (%p907) target = $region52
      $region51: #{tpu_custom_call.1} parent=5 // pred_region
        %s910 = ssub.s32 %s16, 2
        // Predicated region
        $region53: #{tpu_custom_call.1} parent=51 // pred_check
          %p911 = pneg %p113
        $region54: #{tpu_custom_call.1} parent=51 // pred_check_branch
          %913 = sbr.rel (%p911) target = $region56
        $region55: #{tpu_custom_call.1} parent=51 // pred_region
          %s914 = sand.u32 %s98, 1
          %s915 = scalar_lea.sflag [#allocation4], %s914
          %s916 = sand.u32 %s98, 1
          %s917 = scalar_lea.vmem [#allocation8], %s916
          %918 = dma.done %s915, 16
        $region56: #{tpu_custom_call.1} parent=51 // pred_fallthru
          _
      $region52: #{tpu_custom_call.1} parent=5 // pred_fallthru
        _
    $region6: #{tpu_custom_call.1} parent=1 // loop_footer
      %s20 = sadd.s32 1, %s16
    $region7: #{tpu_custom_call.1} parent=1 // loop_footer_branch
      %15 = sbr.rel target = $region3
    $region8: #{tpu_custom_call.1} parent=1 // loop_exit
      _
    %919 = vsyncpa [#allocation3], 1
    %s920 = scalar_lea.sflag [#allocation3], 1
    %921 = vsyncpa %s920, 1
    %922 = vsyncpa [#allocation6], 1
    %923 = vsyncpa [#allocation4], 1
    %s924 = scalar_lea.sflag [#allocation4], 1
    %925 = vsyncpa %s924, 1

</llo_original>
